<compile_context>
chip_gen: v6e
topology: v6e:2x2x1
jax: 0.10.0
libtpu: 0.0.40
codegen_flags: <defaults>
</compile_context>

<pallas_src>
import jax
import jax.numpy as jnp
from jax import lax
from jax.experimental import pallas as pl
from jax.experimental.pallas import tpu as pltpu


def _round_up(x, m):
    return (x + m - 1) // m * m


def _pick_tile_b(B):
    if B <= 128:
        return _round_up(max(B, 1), 16)   # single tile, bf16 sublane aligned
    if B <= 512:
        return 128                        # >=2 grid steps (v7x: both TCs)
    return 256                            # fills 256-wide MXU, fewer steps


def _disc_mlp_kernel(x_ref, lab_ref, w1_ref, emb_ref, b1_ref, w2_ref, b2_ref,
                     w3_ref, b3_ref, o_ref):
    # x:    (TILE_B, D_pad)  f32/bf16  flattened image features (streamed)
    # lab:  (TILE_B, 1)      int32     labels (streamed, tiny)
    # w1:   (D_pad, 512)     bf16      image rows of layer-1 weight (resident)
    # emb:  (N_pad, 512)     bf16      emb @ w1[label rows], padded (resident)
    # b1:   (1, 512)         f32
    # w2:   (512, 256)       bf16
    # b2:   (1, 256)         f32
    # w3:   (1, 256)         f32       layer-3 weight as a lane-aligned row
    # b3:   (1, 1)           f32       SMEM scalar
    # o:    (TILE_B, 1)      f32
    tile_b = x_ref.shape[0]
    n_pad = emb_ref.shape[0]

    x = x_ref[...].astype(jnp.bfloat16)
    h1 = jnp.dot(x, w1_ref[...], preferred_element_type=jnp.float32)

    # Label-embedding bias formed in-kernel: one-hot (tile_b, N_pad) bf16 MXU
    # matmul against the resident folded embedding table.
    one_hot = (lax.broadcasted_iota(jnp.int32, (tile_b, n_pad), 1)
               == lab_ref[...]).astype(jnp.bfloat16)
    h1 = h1 + jnp.dot(one_hot, emb_ref[...], preferred_element_type=jnp.float32)
    h1 = h1 + b1_ref[...]
    h1 = jnp.where(h1 > 0, h1, 0.2 * h1)                      # LeakyReLU(0.2)

    h2 = jnp.dot(h1.astype(jnp.bfloat16), w2_ref[...],
                 preferred_element_type=jnp.float32)
    h2 = h2 + b2_ref[...]
    h2 = jnp.where(h2 > 0, h2, 0.2 * h2)                      # LeakyReLU(0.2)

    # Layer 3 (256 -> 1): VPU multiply + XLU lane-reduce (no padded MXU matmul).
    h3 = jnp.sum(h2 * w3_ref[...], axis=-1, keepdims=True) + b3_ref[0, 0]
    o_ref[...] = pl.reciprocal(1.0 + jnp.exp(-h3), approx=False)   # Sigmoid


def prepare_params(params, *, img_shape, n_classes):
    """One-time parameter prep: padding, bf16 cast, embedding fold."""
    c, h, w = img_shape
    chw = c * h * w
    d_pad = _round_up(chw, 128)
    n_pad = _round_up(n_classes, 128)

    w1 = params["w1"].astype(jnp.float32)                 # (chw + n_classes, 512)
    w1_img = jnp.zeros((d_pad, 512), jnp.float32).at[:chw, :].set(w1[:chw, :])
    # Fold the embedding through layer 1:  emb(l) @ w1[chw:, :]  ==  T[l]
    emb_bias = params["emb"].astype(jnp.float32) @ w1[chw:, :]    # (n_classes, 512)
    emb_pad = jnp.zeros((n_pad, 512), jnp.float32).at[:n_classes, :].set(emb_bias)

    return {
        "w1_img": w1_img.astype(jnp.bfloat16),
        "emb_bias": emb_pad.astype(jnp.bfloat16),
        "b1": params["b1"].reshape(1, 512).astype(jnp.float32),
        "w2": params["w2"].astype(jnp.bfloat16),
        "b2": params["b2"].reshape(1, 256).astype(jnp.float32),
        "w3_row": params["w3"].reshape(1, 256).astype(jnp.float32),
        "b3": params["b3"].reshape(1, 1).astype(jnp.float32),
    }


@jax.jit
def discriminator_forward(img, labels, prep):
    """Replicates Discriminator.forward(img, labels). Returns (B, 1) f32."""
    B = img.shape[0]
    img_flat = img.reshape(B, -1)
    chw = img_flat.shape[-1]
    d_pad = prep["w1_img"].shape[0]

    tile_b = _pick_tile_b(B)
    b_pad = _round_up(B, tile_b)

    if b_pad == B and d_pad == chw:
        # Zero-copy fast path: stream raw image features, cast bf16 in-kernel.
        x = img_flat
        lab = labels.astype(jnp.int32).reshape(B, 1)
    else:
        # Fallback: single padded copy (ragged feature dim or partial tile).
        x = jnp.zeros((b_pad, d_pad), jnp.bfloat16)
        x = x.at[:B, :chw].set(img_flat.astype(jnp.bfloat16))
        lab = jnp.zeros((b_pad, 1), jnp.int32).at[:B, 0].set(
            labels.astype(jnp.int32))

    grid = (b_pad // tile_b,)
    n_pad = prep["emb_bias"].shape[0]
    flops = 2 * b_pad * (d_pad * 512 + n_pad * 512 + 512 * 256 + 256)
    bytes_accessed = int(
        x.size * x.dtype.itemsize + lab.size * 4 + b_pad * 4
        + sum(prep[k].size * prep[k].dtype.itemsize
              for k in ("w1_img", "emb_bias", "b1", "w2", "b2", "w3_row", "b3")))

    out = pl.pallas_call(
        _disc_mlp_kernel,
        out_shape=jax.ShapeDtypeStruct((b_pad, 1), jnp.float32),
        grid=grid,
        in_specs=[
            pl.BlockSpec((tile_b, d_pad), lambda i: (i, 0)),   # x (streamed)
            pl.BlockSpec((tile_b, 1), lambda i: (i, 0)),       # labels (tiny)
            pl.BlockSpec((d_pad, 512), lambda i: (0, 0)),      # w1 (resident)
            pl.BlockSpec((n_pad, 512), lambda i: (0, 0)),      # emb_bias (res.)
            pl.BlockSpec((1, 512), lambda i: (0, 0)),          # b1
            pl.BlockSpec((512, 256), lambda i: (0, 0)),        # w2 (resident)
            pl.BlockSpec((1, 256), lambda i: (0, 0)),          # b2
            pl.BlockSpec((1, 256), lambda i: (0, 0)),          # w3 row
            pl.BlockSpec(memory_space=pltpu.MemorySpace.SMEM), # b3 scalar
        ],
        out_specs=pl.BlockSpec((tile_b, 1), lambda i: (i, 0)),
        compiler_params=pltpu.CompilerParams(
            dimension_semantics=("parallel",)),
        cost_estimate=pl.CostEstimate(
            flops=flops, transcendentals=b_pad,
            bytes_accessed=bytes_accessed),
    )(x, lab, prep["w1_img"], prep["emb_bias"], prep["b1"], prep["w2"],
      prep["b2"], prep["w3_row"], prep["b3"])

    return out[:B]                                             # (B, 1)


def init_params(key, img_shape=(1, 32, 32), n_classes=10):
    """Deterministic synthetic parameters matching the PyTorch module shapes."""
    c, h, w = img_shape
    d_in = n_classes + c * h * w
    k = jax.random.split(key, 7)

    def u(kk, shape, fan_in):
        bound = 1.0 / jnp.sqrt(fan_in)
        return jax.random.uniform(kk, shape, jnp.float32, -bound, bound)

    return {
        "emb": jax.random.normal(k[0], (n_classes, n_classes), jnp.float32),
        "w1": u(k[1], (d_in, 512), d_in),
        "b1": u(k[2], (512,), d_in),
        "w2": u(k[3], (512, 256), 512),
        "b2": u(k[4], (256,), 512),
        "w3": u(k[5], (256, 1), 256),
        "b3": u(k[6], (1,), 256),
    }


def _reference_forward(img, labels, params):
    """Pure-JAX f32 reference of the PyTorch forward (sanity check)."""
    B = img.shape[0]
    d_in = jnp.concatenate(
        [img.reshape(B, -1), jnp.take(params["emb"], labels, axis=0)], axis=-1)
    h = d_in @ params["w1"] + params["b1"]
    h = jnp.where(h > 0, h, 0.2 * h)
    h = h @ params["w2"] + params["b2"]
    h = jnp.where(h > 0, h, 0.2 * h)
    h = h @ params["w3"] + params["b3"]
    return jax.nn.sigmoid(h)


if __name__ == "__main__":
    # Small shapes: channels=1, img_size=16, n_classes=10
    channels, img_size, n_classes = 1, 16, 10
    img_shape = (channels, img_size, img_size)

    key = jax.random.PRNGKey(0)
    k_img, k_lab, k_par, k_img2, k_lab2 = jax.random.split(key, 5)

    params = init_params(k_par, img_shape=img_shape, n_classes=n_classes)
    prep = prepare_params(params, img_shape=img_shape, n_classes=n_classes)
    prep = jax.tree_util.tree_map(jax.block_until_ready, prep)

    # 1) Tiny batch (padded single-tile path), B = 2.
    B = 2
    img = jax.random.normal(k_img, (B,) + img_shape, jnp.float32)      # NCHW
    labels = jax.random.randint(k_lab, (B,), 0, n_classes, jnp.int32)
    out = jax.block_until_ready(discriminator_forward(img, labels, prep))
    ref = _reference_forward(img, labels, params)
    assert out.shape == (B, 1), out.shape
    # bf16 matmul operands with f32 accumulation -> relaxed tolerance vs f32 ref.
    assert jnp.allclose(out, ref, atol=2e-2, rtol=0.0), (out, ref)

    # 2) Larger batch (zero-copy x fast path, 2-step "parallel" grid).
    B2 = 256
    img2 = jax.random.normal(k_img2, (B2,) + img_shape, jnp.float32)
    labels2 = jax.random.randint(k_lab2, (B2,), 0, n_classes, jnp.int32)
    out2 = jax.block_until_ready(discriminator_forward(img2, labels2, prep))
    ref2 = _reference_forward(img2, labels2, params)
    assert out2.shape == (B2, 1), out2.shape
    assert jnp.allclose(out2, ref2, atol=2e-2, rtol=0.0)

    print("KERNEL_OK")
</pallas_src>

<mosaic_0001>
module attributes {stable_mosaic.version = 11 : i64} {
  func.func @_disc_mlp_kernel(%arg0: i32, %arg1: memref<16x256xbf16, #tpu.memory_space<vmem>>, %arg2: memref<16x1xi32, #tpu.memory_space<vmem>>, %arg3: memref<256x512xbf16, #tpu.memory_space<vmem>>, %arg4: memref<128x512xbf16, #tpu.memory_space<vmem>>, %arg5: memref<1x512xf32, #tpu.memory_space<vmem>>, %arg6: memref<512x256xbf16, #tpu.memory_space<vmem>>, %arg7: memref<1x256xf32, #tpu.memory_space<vmem>>, %arg8: memref<1x256xf32, #tpu.memory_space<vmem>>, %arg9: memref<1x1xf32, #tpu.memory_space<smem>>, %arg10: memref<16x1xf32, #tpu.memory_space<vmem>>) attributes {dimension_semantics = [#tpu.dimension_semantics<parallel>], iteration_bounds = array<i64: 1>, scalar_prefetch = 0 : i64, scratch_operands = 0 : i64, tpu.core_type = #tpu.core_type<tc>, window_params = [{transform_indices = @transform_0, window_bounds = array<i64: 16, 256>}, {transform_indices = @transform_1, window_bounds = array<i64: 16, 1>}, {pipeline_mode = #tpu.pipeline_mode<synchronous>, transform_indices = @transform_2, window_bounds = array<i64: 256, 512>}, {pipeline_mode = #tpu.pipeline_mode<synchronous>, transform_indices = @transform_3, window_bounds = array<i64: 128, 512>}, {pipeline_mode = #tpu.pipeline_mode<synchronous>, transform_indices = @transform_4, window_bounds = array<i64: 1, 512>}, {pipeline_mode = #tpu.pipeline_mode<synchronous>, transform_indices = @transform_5, window_bounds = array<i64: 512, 256>}, {pipeline_mode = #tpu.pipeline_mode<synchronous>, transform_indices = @transform_6, window_bounds = array<i64: 1, 256>}, {pipeline_mode = #tpu.pipeline_mode<synchronous>, transform_indices = @transform_7, window_bounds = array<i64: 1, 256>}, {transform_indices = @transform_8, window_bounds = array<i64: 1, 1>}, {transform_indices = @transform_9, window_bounds = array<i64: 16, 1>}]} {
    %c0 = arith.constant 0 : index
    %c0_0 = arith.constant 0 : index
    %0 = vector.load %arg1[%c0, %c0_0] : memref<16x256xbf16, #tpu.memory_space<vmem>>, vector<16x256xbf16>
    %c0_1 = arith.constant 0 : index
    %c0_2 = arith.constant 0 : index
    %1 = vector.load %arg3[%c0_1, %c0_2] : memref<256x512xbf16, #tpu.memory_space<vmem>>, vector<256x512xbf16>
    %cst = arith.constant dense<0.000000e+00> : vector<16x512xf32>
    %2 = tpu.matmul %0, %1, %cst {dimension_numbers = #tpu.dot_dimension_numbers<[1], [0], [0], [1], [0, 0, 1, 1], [], []>} : vector<16x256xbf16>, vector<256x512xbf16>, vector<16x512xf32> -> vector<16x512xf32>
    %3 = tpu.iota {dimensions = array<i32: 1>} : vector<16x128xi32>
    %c0_3 = arith.constant 0 : index
    %c0_4 = arith.constant 0 : index
    %4 = vector.load %arg2[%c0_3, %c0_4] : memref<16x1xi32, #tpu.memory_space<vmem>>, vector<16x1xi32>
    %5 = vector.broadcast %4 : vector<16x1xi32> to vector<16x128xi32>
    %6 = arith.cmpi eq, %3, %5 : vector<16x128xi32>
    %7 = arith.extui %6 : vector<16x128xi1> to vector<16x128xi32>
    %8 = arith.sitofp %7 : vector<16x128xi32> to vector<16x128xf32>
    %9 = arith.truncf %8 : vector<16x128xf32> to vector<16x128xbf16>
    %c0_5 = arith.constant 0 : index
    %c0_6 = arith.constant 0 : index
    %10 = vector.load %arg4[%c0_5, %c0_6] : memref<128x512xbf16, #tpu.memory_space<vmem>>, vector<128x512xbf16>
    %cst_7 = arith.constant dense<0.000000e+00> : vector<16x512xf32>
    %11 = tpu.matmul %9, %10, %cst_7 {dimension_numbers = #tpu.dot_dimension_numbers<[1], [0], [0], [1], [0, 0, 1, 1], [], []>} : vector<16x128xbf16>, vector<128x512xbf16>, vector<16x512xf32> -> vector<16x512xf32>
    %12 = arith.addf %2, %11 : vector<16x512xf32>
    %c0_8 = arith.constant 0 : index
    %c0_9 = arith.constant 0 : index
    %13 = vector.load %arg5[%c0_8, %c0_9] : memref<1x512xf32, #tpu.memory_space<vmem>>, vector<1x512xf32>
    %14 = vector.broadcast %13 : vector<1x512xf32> to vector<16x512xf32>
    %15 = arith.addf %12, %14 : vector<16x512xf32>
    %cst_10 = arith.constant 0.000000e+00 : f32
    %16 = vector.broadcast %cst_10 : f32 to vector<16x512xf32>
    %17 = arith.cmpf ogt, %15, %16 : vector<16x512xf32>
    %cst_11 = arith.constant 2.000000e-01 : f32
    %18 = vector.broadcast %cst_11 : f32 to vector<16x512xf32>
    %19 = arith.mulf %18, %15 : vector<16x512xf32>
    %20 = arith.select %17, %15, %19 : vector<16x512xi1>, vector<16x512xf32>
    %21 = arith.truncf %20 : vector<16x512xf32> to vector<16x512xbf16>
    %c0_12 = arith.constant 0 : index
    %c0_13 = arith.constant 0 : index
    %22 = vector.load %arg6[%c0_12, %c0_13] : memref<512x256xbf16, #tpu.memory_space<vmem>>, vector<512x256xbf16>
    %cst_14 = arith.constant dense<0.000000e+00> : vector<16x256xf32>
    %23 = tpu.matmul %21, %22, %cst_14 {dimension_numbers = #tpu.dot_dimension_numbers<[1], [0], [0], [1], [0, 0, 1, 1], [], []>} : vector<16x512xbf16>, vector<512x256xbf16>, vector<16x256xf32> -> vector<16x256xf32>
    %c0_15 = arith.constant 0 : index
    %c0_16 = arith.constant 0 : index
    %24 = vector.load %arg7[%c0_15, %c0_16] : memref<1x256xf32, #tpu.memory_space<vmem>>, vector<1x256xf32>
    %25 = vector.broadcast %24 : vector<1x256xf32> to vector<16x256xf32>
    %26 = arith.addf %23, %25 : vector<16x256xf32>
    %cst_17 = arith.constant 0.000000e+00 : f32
    %27 = vector.broadcast %cst_17 : f32 to vector<16x256xf32>
    %28 = arith.cmpf ogt, %26, %27 : vector<16x256xf32>
    %cst_18 = arith.constant 2.000000e-01 : f32
    %29 = vector.broadcast %cst_18 : f32 to vector<16x256xf32>
    %30 = arith.mulf %29, %26 : vector<16x256xf32>
    %31 = arith.select %28, %26, %30 : vector<16x256xi1>, vector<16x256xf32>
    %c0_19 = arith.constant 0 : index
    %c0_20 = arith.constant 0 : index
    %32 = vector.load %arg8[%c0_19, %c0_20] : memref<1x256xf32, #tpu.memory_space<vmem>>, vector<1x256xf32>
    %33 = vector.broadcast %32 : vector<1x256xf32> to vector<16x256xf32>
    %34 = arith.mulf %31, %33 : vector<16x256xf32>
    %cst_21 = arith.constant dense<0.000000e+00> : vector<16xf32>
    %35 = vector.multi_reduction <add>, %34, %cst_21 [1] : vector<16x256xf32> to vector<16xf32>
    %36 = vector.shape_cast %35 : vector<16xf32> to vector<16x1xf32>
    %c0_22 = arith.constant 0 : index
    %c0_23 = arith.constant 0 : index
    %37 = memref.load %arg9[%c0_22, %c0_23] : memref<1x1xf32, #tpu.memory_space<smem>>
    %38 = vector.broadcast %37 : f32 to vector<16x1xf32>
    %39 = arith.addf %36, %38 : vector<16x1xf32>
    %cst_24 = arith.constant 0.000000e+00 : f32
    %40 = vector.broadcast %cst_24 : f32 to vector<16x1xf32>
    %41 = arith.subf %40, %39 : vector<16x1xf32>
    %42 = math.exp %41 : vector<16x1xf32>
    %cst_25 = arith.constant 1.000000e+00 : f32
    %43 = vector.broadcast %cst_25 : f32 to vector<16x1xf32>
    %44 = arith.addf %43, %42 : vector<16x1xf32>
    %45 = tpu.reciprocal %44 : vector<16x1xf32> -> vector<16x1xf32>
    %c0_26 = arith.constant 0 : index
    %c0_27 = arith.constant 0 : index
    %46 = vector.load %arg10[%c0_26, %c0_27] : memref<16x1xf32, #tpu.memory_space<vmem>>, vector<16x1xf32>
    tpu.vector_store %arg10[%c0_26, %c0_27], %45 {strides = array<i32>} : memref<16x1xf32, #tpu.memory_space<vmem>>, vector<16x1xf32>,
    return
  }
  func.func @transform_0(%arg0: i32) -> (i32, i32) {
    %c0_i32 = arith.constant 0 : i32
    %c0_i32_0 = arith.constant 0 : i32
    return %arg0, %c0_i32 : i32, i32
  }
  func.func @transform_1(%arg0: i32) -> (i32, i32) {
    %c0_i32 = arith.constant 0 : i32
    %c0_i32_0 = arith.constant 0 : i32
    return %arg0, %c0_i32 : i32, i32
  }
  func.func @transform_2(%arg0: i32) -> (i32, i32) {
    %c0_i32 = arith.constant 0 : i32
    %c0_i32_0 = arith.constant 0 : i32
    %c0_i32_1 = arith.constant 0 : i32
    return %c0_i32, %c0_i32_0 : i32, i32
  }
  func.func @transform_3(%arg0: i32) -> (i32, i32) {
    %c0_i32 = arith.constant 0 : i32
    %c0_i32_0 = arith.constant 0 : i32
    %c0_i32_1 = arith.constant 0 : i32
    return %c0_i32, %c0_i32_0 : i32, i32
  }
  func.func @transform_4(%arg0: i32) -> (i32, i32) {
    %c0_i32 = arith.constant 0 : i32
    %c0_i32_0 = arith.constant 0 : i32
    %c0_i32_1 = arith.constant 0 : i32
    return %c0_i32, %c0_i32_0 : i32, i32
  }
  func.func @transform_5(%arg0: i32) -> (i32, i32) {
    %c0_i32 = arith.constant 0 : i32
    %c0_i32_0 = arith.constant 0 : i32
    %c0_i32_1 = arith.constant 0 : i32
    return %c0_i32, %c0_i32_0 : i32, i32
  }
  func.func @transform_6(%arg0: i32) -> (i32, i32) {
    %c0_i32 = arith.constant 0 : i32
    %c0_i32_0 = arith.constant 0 : i32
    %c0_i32_1 = arith.constant 0 : i32
    return %c0_i32, %c0_i32_0 : i32, i32
  }
  func.func @transform_7(%arg0: i32) -> (i32, i32) {
    %c0_i32 = arith.constant 0 : i32
    %c0_i32_0 = arith.constant 0 : i32
    %c0_i32_1 = arith.constant 0 : i32
    return %c0_i32, %c0_i32_0 : i32, i32
  }
  func.func @transform_8(%arg0: i32) -> (i32, i32) {
    %c0_i32 = arith.constant 0 : i32
    %c0_i32_0 = arith.constant 0 : i32
    %c0_i32_1 = arith.constant 0 : i32
    return %c0_i32, %c0_i32_0 : i32, i32
  }
  func.func @transform_9(%arg0: i32) -> (i32, i32) {
    %c0_i32 = arith.constant 0 : i32
    %c0_i32_0 = arith.constant 0 : i32
    return %arg0, %c0_i32 : i32, i32
  }
}

</mosaic_0001>

<llo_original>
// kernel: discriminator_forward.1
$region0: #{discriminator_forward.1}
  #allocation0 [shape = 'u32[]', space=smem, size = 0x4, offset = 0x4, fixed_abs, tag = 'smem constant byte address 0x4 - core index']
  #allocation1 [shape = 'u32[144,128]{1,0:T(1,128)}', space=vmem, size = 0x12000, scoped, tag = 'internal scratch']
  #allocation2 [shape = 'f32[1,1]{1,0:T(1,128)S(6)}', space=smem, size = 0x200, scoped, tag = 'scoped memory for discriminator_forward.1']
  %s0 = inlined_call_operand.vmem [shape: bf16[16,256], index: 0, kind: input, shape index: {}]
  %s1 = inlined_call_operand.vmem [shape: s32[16,1], index: 1, kind: input, shape index: {}]
  %s2 = inlined_call_operand.hbm [shape: bf16[256,512], index: 2, kind: input, shape index: {}]
  %s3 = inlined_call_operand.hbm [shape: bf16[128,512], index: 3, kind: input, shape index: {}]
  %s4 = inlined_call_operand.vmem [shape: f32[1,512], index: 4, kind: input, shape index: {}]
  %s5 = inlined_call_operand.hbm [shape: bf16[512,256], index: 5, kind: input, shape index: {}]
  %s6 = inlined_call_operand.vmem [shape: f32[1,256], index: 6, kind: input, shape index: {}]
  %s7 = inlined_call_operand.vmem [shape: f32[1,256], index: 7, kind: input, shape index: {}]
  %s8 = inlined_call_operand.<no memory space> [shape: f32[1,1], index: 8, kind: input, shape index: {}]
  %s9 = inlined_call_operand.vmem [shape: f32[16,1], index: 9, kind: output, shape index: {}]
  %s10 = sld [smem:[#allocation0]]
  $region58: #{discriminator_forward.1} parent=0
    _
  %s12 = ssub.s32 1, %s10
  %s13 = scalar_select 0, %s12, %s10
  %14 = sst [smem:[#allocation2]] %s8
  $region1: #{discriminator_forward.1} parent=0
    #allocation3 [shape = 'u8[262144]{0}', space=vmem, size = 0x40000, scoped, tag = 'input window, operand 2, single buffered']
    #allocation4 [shape = 's32[1]{0}', space=sflag, size = 0x4, scoped, tag = 'scoped memory for discriminator_forward.1']
    #allocation5 [shape = 'u8[131072]{0}', space=vmem, size = 0x20000, scoped, tag = 'input window, operand 3, single buffered']
    #allocation6 [shape = 's32[1]{0}', space=sflag, size = 0x4, scoped, tag = 'scoped memory for discriminator_forward.1']
    #allocation7 [shape = 'u8[262144]{0}', space=vmem, size = 0x40000, scoped, tag = 'input window, operand 5, single buffered']
    %15 = vsyncpa [#allocation4], 0
    %16 = vsyncpa [#allocation6], 0
    // Predicated region
    $region2: #{discriminator_forward.1} parent=1 // pred_check
      _
    $region3: #{discriminator_forward.1} parent=1 // pred_check_branch
      %18 = sbr.rel (0) target = $region5
    $region4: #{discriminator_forward.1} parent=1 // pred_region
      _
    $region5: #{discriminator_forward.1} parent=1 // pred_fallthru
      _
    // Predicated region
    $region6: #{discriminator_forward.1} parent=1 // pred_check
      _
    $region7: #{discriminator_forward.1} parent=1 // pred_check_branch
      %20 = sbr.rel (0) target = $region9
    $region8: #{discriminator_forward.1} parent=1 // pred_region
      _
    $region9: #{discriminator_forward.1} parent=1 // pred_fallthru
      _
    // Predicated region
    $region10: #{discriminator_forward.1} parent=1 // pred_check
      _
    $region11: #{discriminator_forward.1} parent=1 // pred_check_branch
      %22 = sbr.rel (0) target = $region13
    $region12: #{discriminator_forward.1} parent=1 // pred_region
      %s24 = ssub.s32 8192, 8192
      %25 = vsyncadd [#allocation4], %s24
      %s26 = sshll.u32 [#allocation3], 4
      %s27 = int_to_ptr.vmem [resolvable:$true] %s26
      %32 = dma.hbm_to_vmem [thread:$0]  %s2, 8192, %s27, [#allocation4], 256, 256, 16
    $region13: #{discriminator_forward.1} parent=1 // pred_fallthru
      _
    // Predicated region
    $region14: #{discriminator_forward.1} parent=1 // pred_check
      _
    $region15: #{discriminator_forward.1} parent=1 // pred_check_branch
      %34 = sbr.rel (0) target = $region17
    $region16: #{discriminator_forward.1} parent=1 // pred_region
      %s36 = ssub.s32 4096, 4096
      %37 = vsyncadd [#allocation6], %s36
      %s38 = sshll.u32 [#allocation5], 4
      %s39 = int_to_ptr.vmem [resolvable:$true] %s38
      %44 = dma.hbm_to_vmem [thread:$0]  %s3, 4096, %s39, [#allocation6], 256, 256, 16
    $region17: #{discriminator_forward.1} parent=1 // pred_fallthru
      _
    // Predicated region
    $region18: #{discriminator_forward.1} parent=1 // pred_check
      _
    $region19: #{discriminator_forward.1} parent=1 // pred_check_branch
      %46 = sbr.rel (0) target = $region21
    $region20: #{discriminator_forward.1} parent=1 // pred_region
      _
    $region21: #{discriminator_forward.1} parent=1 // pred_fallthru
      _
    // Predicated region
    $region22: #{discriminator_forward.1} parent=1 // pred_check
      _
    $region23: #{discriminator_forward.1} parent=1 // pred_check_branch
      %48 = sbr.rel (0) target = $region25
    $region24: #{discriminator_forward.1} parent=1 // pred_region
      %s50 = ssub.s32 8192, 8192
      %51 = vsyncadd [#allocation6], %s50
      %s52 = sshll.u32 [#allocation7], 4
      %s53 = int_to_ptr.vmem [resolvable:$true] %s52
      %58 = dma.hbm_to_vmem [thread:$0]  %s5, 8192, %s53, [#allocation6], 128, 128, 8
    $region25: #{discriminator_forward.1} parent=1 // pred_fallthru
      _
    // Predicated region
    $region26: #{discriminator_forward.1} parent=1 // pred_check
      _
    $region27: #{discriminator_forward.1} parent=1 // pred_check_branch
      %60 = sbr.rel (0) target = $region29
    $region28: #{discriminator_forward.1} parent=1 // pred_region
      _
    $region29: #{discriminator_forward.1} parent=1 // pred_fallthru
      _
    // Predicated region
    $region30: #{discriminator_forward.1} parent=1 // pred_check
      _
    $region31: #{discriminator_forward.1} parent=1 // pred_check_branch
      %62 = sbr.rel (0) target = $region33
    $region32: #{discriminator_forward.1} parent=1 // pred_region
      _
    $region33: #{discriminator_forward.1} parent=1 // pred_fallthru
      _
    // Predicated region
    $region34: #{discriminator_forward.1} parent=1 // pred_check
      _
    $region35: #{discriminator_forward.1} parent=1 // pred_check_branch
      %64 = sbr.rel (0) target = $region37
    $region36: #{discriminator_forward.1} parent=1 // pred_region
      _
    $region37: #{discriminator_forward.1} parent=1 // pred_fallthru
      _
    // Predicated region
    $region38: #{discriminator_forward.1} parent=1 // pred_check
      _
    $region39: #{discriminator_forward.1} parent=1 // pred_check_branch
      %66 = sbr.rel (0) target = $region41
    $region40: #{discriminator_forward.1} parent=1 // pred_region
      %67 = dma.done [#allocation4], 8192
    $region41: #{discriminator_forward.1} parent=1 // pred_fallthru
      _
    // Predicated region
    $region42: #{discriminator_forward.1} parent=1 // pred_check
      _
    $region43: #{discriminator_forward.1} parent=1 // pred_check_branch
      %69 = sbr.rel (0) target = $region45
    $region44: #{discriminator_forward.1} parent=1 // pred_region
      %70 = dma.done [#allocation6], 4096
    $region45: #{discriminator_forward.1} parent=1 // pred_fallthru
      _
    // Predicated region
    $region46: #{discriminator_forward.1} parent=1 // pred_check
      _
    $region47: #{discriminator_forward.1} parent=1 // pred_check_branch
      %72 = sbr.rel (0) target = $region49
    $region48: #{discriminator_forward.1} parent=1 // pred_region
      %73 = dma.done [#allocation6], 8192
    $region49: #{discriminator_forward.1} parent=1 // pred_fallthru
      _
    %v75 = vld [vmem:[%s0] sm:$0xff]
    %v76 = vld [vmem:[%s0 + $0x8] sm:$0xff]
    %v77 = vld [vmem:[#allocation3] sm:$0xff]
    %v78 = vld [vmem:[#allocation3 + $0x8] sm:$0xff]
    %v79 = vld [vmem:[#allocation3 + $0x10] sm:$0xff]
    %v80 = vld [vmem:[#allocation3 + $0x18] sm:$0xff]
    %v81 = vld [vmem:[#allocation3 + $0x20] sm:$0xff]
    %v82 = vld [vmem:[#allocation3 + $0x28] sm:$0xff]
    %v83 = vld [vmem:[#allocation3 + $0x30] sm:$0xff]
    %v84 = vld [vmem:[#allocation3 + $0x38] sm:$0xff]
    %v85 = vld [vmem:[#allocation3 + $0x40] sm:$0xff]
    %v86 = vld [vmem:[#allocation3 + $0x48] sm:$0xff]
    %v87 = vld [vmem:[#allocation3 + $0x50] sm:$0xff]
    %v88 = vld [vmem:[#allocation3 + $0x58] sm:$0xff]
    %v89 = vld [vmem:[#allocation3 + $0x60] sm:$0xff]
    %v90 = vld [vmem:[#allocation3 + $0x68] sm:$0xff]
    %v91 = vld [vmem:[#allocation3 + $0x70] sm:$0xff]
    %v92 = vld [vmem:[#allocation3 + $0x78] sm:$0xff]
    %v93 = vld [vmem:[#allocation3 + $0x80] sm:$0xff]
    %v94 = vld [vmem:[#allocation3 + $0x88] sm:$0xff]
    %v95 = vld [vmem:[#allocation3 + $0x90] sm:$0xff]
    %v96 = vld [vmem:[#allocation3 + $0x98] sm:$0xff]
    %v97 = vld [vmem:[#allocation3 + $0xa0] sm:$0xff]
    %v98 = vld [vmem:[#allocation3 + $0xa8] sm:$0xff]
    %v99 = vld [vmem:[#allocation3 + $0xb0] sm:$0xff]
    %v100 = vld [vmem:[#allocation3 + $0xb8] sm:$0xff]
    %v101 = vld [vmem:[#allocation3 + $0xc0] sm:$0xff]
    %v102 = vld [vmem:[#allocation3 + $0xc8] sm:$0xff]
    %v103 = vld [vmem:[#allocation3 + $0xd0] sm:$0xff]
    %v104 = vld [vmem:[#allocation3 + $0xd8] sm:$0xff]
    %v105 = vld [vmem:[#allocation3 + $0xe0] sm:$0xff]
    %v106 = vld [vmem:[#allocation3 + $0xe8] sm:$0xff]
    %v107 = vld [vmem:[#allocation3 + $0xf0] sm:$0xff]
    %v108 = vld [vmem:[#allocation3 + $0xf8] sm:$0xff]
    %v109 = vld [vmem:[#allocation3 + $0x100] sm:$0xff]
    %v110 = vld [vmem:[#allocation3 + $0x108] sm:$0xff]
    %v111 = vld [vmem:[#allocation3 + $0x110] sm:$0xff]
    %v112 = vld [vmem:[#allocation3 + $0x118] sm:$0xff]
    %v113 = vld [vmem:[#allocation3 + $0x120] sm:$0xff]
    %v114 = vld [vmem:[#allocation3 + $0x128] sm:$0xff]
    %v115 = vld [vmem:[#allocation3 + $0x130] sm:$0xff]
    %v116 = vld [vmem:[#allocation3 + $0x138] sm:$0xff]
    %v117 = vld [vmem:[#allocation3 + $0x140] sm:$0xff]
    %v118 = vld [vmem:[#allocation3 + $0x148] sm:$0xff]
    %v119 = vld [vmem:[#allocation3 + $0x150] sm:$0xff]
    %v120 = vld [vmem:[#allocation3 + $0x158] sm:$0xff]
    %v121 = vld [vmem:[#allocation3 + $0x160] sm:$0xff]
    %v122 = vld [vmem:[#allocation3 + $0x168] sm:$0xff]
    %v123 = vld [vmem:[#allocation3 + $0x170] sm:$0xff]
    %v124 = vld [vmem:[#allocation3 + $0x178] sm:$0xff]
    %v125 = vld [vmem:[#allocation3 + $0x180] sm:$0xff]
    %v126 = vld [vmem:[#allocation3 + $0x188] sm:$0xff]
    %v127 = vld [vmem:[#allocation3 + $0x190] sm:$0xff]
    %v128 = vld [vmem:[#allocation3 + $0x198] sm:$0xff]
    %v129 = vld [vmem:[#allocation3 + $0x1a0] sm:$0xff]
    %v130 = vld [vmem:[#allocation3 + $0x1a8] sm:$0xff]
    %v131 = vld [vmem:[#allocation3 + $0x1b0] sm:$0xff]
    %v132 = vld [vmem:[#allocation3 + $0x1b8] sm:$0xff]
    %v133 = vld [vmem:[#allocation3 + $0x1c0] sm:$0xff]
    %v134 = vld [vmem:[#allocation3 + $0x1c8] sm:$0xff]
    %v135 = vld [vmem:[#allocation3 + $0x1d0] sm:$0xff]
    %v136 = vld [vmem:[#allocation3 + $0x1d8] sm:$0xff]
    %v137 = vld [vmem:[#allocation3 + $0x1e0] sm:$0xff]
    %v138 = vld [vmem:[#allocation3 + $0x1e8] sm:$0xff]
    %v139 = vld [vmem:[#allocation3 + $0x1f0] sm:$0xff]
    %v140 = vld [vmem:[#allocation3 + $0x1f8] sm:$0xff]
    %v141 = vlaneseq
    %v142 = vand.u32 %v141, 127
    %v143 = vld [vmem:[%s1] sm:$0xff]
    %v144 = vld [vmem:[%s1 + $0x8] sm:$0xff]
    %145 = vset.pattern.permute.xlu0 0
    %146 = vperm.xlu0 %145, %v143
    %v147 = vpop.permute.xlu0 %146
    %148 = vset.pattern.permute.xlu0 0
    %149 = vperm.xlu0 %148, %v144
    %v150 = vpop.permute.xlu0 %149
    %vm151 = vcmp.eq.s32.totalorder %v142, %v147
    %vm152 = vcmp.eq.s32.totalorder %v142, %v150
    %v153 = vsel %vm151, 1, 0
    %v154 = vsel %vm152, 1, 0
    %v155 = vcvt.s32.f32 %v153
    %v156 = vcvt.s32.f32 %v154
    %v157 = vpack.c.bf16 %v156, %v155
    %v158 = vld [vmem:[#allocation5] sm:$0xff]
    %v159 = vld [vmem:[#allocation5 + $0x8] sm:$0xff]
    %v160 = vld [vmem:[#allocation5 + $0x10] sm:$0xff]
    %v161 = vld [vmem:[#allocation5 + $0x18] sm:$0xff]
    %v162 = vld [vmem:[#allocation5 + $0x20] sm:$0xff]
    %v163 = vld [vmem:[#allocation5 + $0x28] sm:$0xff]
    %v164 = vld [vmem:[#allocation5 + $0x30] sm:$0xff]
    %v165 = vld [vmem:[#allocation5 + $0x38] sm:$0xff]
    %v166 = vld [vmem:[#allocation5 + $0x40] sm:$0xff]
    %v167 = vld [vmem:[#allocation5 + $0x48] sm:$0xff]
    %v168 = vld [vmem:[#allocation5 + $0x50] sm:$0xff]
    %v169 = vld [vmem:[#allocation5 + $0x58] sm:$0xff]
    %v170 = vld [vmem:[#allocation5 + $0x60] sm:$0xff]
    %v171 = vld [vmem:[#allocation5 + $0x68] sm:$0xff]
    %v172 = vld [vmem:[#allocation5 + $0x70] sm:$0xff]
    %v173 = vld [vmem:[#allocation5 + $0x78] sm:$0xff]
    %v174 = vld [vmem:[#allocation5 + $0x80] sm:$0xff]
    %v175 = vld [vmem:[#allocation5 + $0x88] sm:$0xff]
    %v176 = vld [vmem:[#allocation5 + $0x90] sm:$0xff]
    %v177 = vld [vmem:[#allocation5 + $0x98] sm:$0xff]
    %v178 = vld [vmem:[#allocation5 + $0xa0] sm:$0xff]
    %v179 = vld [vmem:[#allocation5 + $0xa8] sm:$0xff]
    %v180 = vld [vmem:[#allocation5 + $0xb0] sm:$0xff]
    %v181 = vld [vmem:[#allocation5 + $0xb8] sm:$0xff]
    %v182 = vld [vmem:[#allocation5 + $0xc0] sm:$0xff]
    %v183 = vld [vmem:[#allocation5 + $0xc8] sm:$0xff]
    %v184 = vld [vmem:[#allocation5 + $0xd0] sm:$0xff]
    %v185 = vld [vmem:[#allocation5 + $0xd8] sm:$0xff]
    %v186 = vld [vmem:[#allocation5 + $0xe0] sm:$0xff]
    %v187 = vld [vmem:[#allocation5 + $0xe8] sm:$0xff]
    %v188 = vld [vmem:[#allocation5 + $0xf0] sm:$0xff]
    %v189 = vld [vmem:[#allocation5 + $0xf8] sm:$0xff]
    %v222 = vunpack.c.l.b16 %v158
    %v223 = vunpack.c.h.b16 %v158
    %v224 = vunpack.c.l.b16 %v159
    %v225 = vunpack.c.h.b16 %v159
    %v226 = vunpack.c.l.b16 %v160
    %v227 = vunpack.c.h.b16 %v160
    %v228 = vunpack.c.l.b16 %v161
    %v229 = vunpack.c.h.b16 %v161
    %v230 = vunpack.c.l.b16 %v162
    %v231 = vunpack.c.h.b16 %v162
    %v232 = vunpack.c.l.b16 %v163
    %v233 = vunpack.c.h.b16 %v163
    %v234 = vunpack.c.l.b16 %v164
    %v235 = vunpack.c.h.b16 %v164
    %v236 = vunpack.c.l.b16 %v165
    %v237 = vunpack.c.h.b16 %v165
    %v238 = vunpack.c.l.b16 %v166
    %v239 = vunpack.c.h.b16 %v166
    %v240 = vunpack.c.l.b16 %v167
    %v241 = vunpack.c.h.b16 %v167
    %v242 = vunpack.c.l.b16 %v168
    %v243 = vunpack.c.h.b16 %v168
    %v244 = vunpack.c.l.b16 %v169
    %v245 = vunpack.c.h.b16 %v169
    %v246 = vunpack.c.l.b16 %v170
    %v247 = vunpack.c.h.b16 %v170
    %v248 = vunpack.c.l.b16 %v171
    %v249 = vunpack.c.h.b16 %v171
    %v250 = vunpack.c.l.b16 %v172
    %v251 = vunpack.c.h.b16 %v172
    %v252 = vunpack.c.l.b16 %v173
    %v253 = vunpack.c.h.b16 %v173
    %v254 = vunpack.c.l.b16 %v174
    %v255 = vunpack.c.h.b16 %v174
    %v256 = vunpack.c.l.b16 %v175
    %v257 = vunpack.c.h.b16 %v175
    %v258 = vunpack.c.l.b16 %v176
    %v259 = vunpack.c.h.b16 %v176
    %v260 = vunpack.c.l.b16 %v177
    %v261 = vunpack.c.h.b16 %v177
    %v262 = vunpack.c.l.b16 %v178
    %v263 = vunpack.c.h.b16 %v178
    %v264 = vunpack.c.l.b16 %v179
    %v265 = vunpack.c.h.b16 %v179
    %v266 = vunpack.c.l.b16 %v180
    %v267 = vunpack.c.h.b16 %v180
    %v268 = vunpack.c.l.b16 %v181
    %v269 = vunpack.c.h.b16 %v181
    %v270 = vunpack.c.l.b16 %v182
    %v271 = vunpack.c.h.b16 %v182
    %v272 = vunpack.c.l.b16 %v183
    %v273 = vunpack.c.h.b16 %v183
    %v274 = vunpack.c.l.b16 %v184
    %v275 = vunpack.c.h.b16 %v184
    %v276 = vunpack.c.l.b16 %v185
    %v277 = vunpack.c.h.b16 %v185
    %v278 = vunpack.c.l.b16 %v186
    %v279 = vunpack.c.h.b16 %v186
    %v280 = vunpack.c.l.b16 %v187
    %v281 = vunpack.c.h.b16 %v187
    %v282 = vunpack.c.l.b16 %v188
    %v283 = vunpack.c.h.b16 %v188
    %v284 = vunpack.c.l.b16 %v189
    %v285 = vunpack.c.h.b16 %v189
    %v286 = vpack.c.b16 %v226, %v222
    %v287 = vpack.c.b16 %v227, %v223
    %v288 = vpack.c.b16 %v228, %v224
    %v289 = vpack.c.b16 %v229, %v225
    %v290 = vpack.c.b16 %v234, %v230
    %v291 = vpack.c.b16 %v235, %v231
    %v292 = vpack.c.b16 %v236, %v232
    %v293 = vpack.c.b16 %v237, %v233
    %v294 = vpack.c.b16 %v242, %v238
    %v295 = vpack.c.b16 %v243, %v239
    %v296 = vpack.c.b16 %v244, %v240
    %v297 = vpack.c.b16 %v245, %v241
    %v298 = vpack.c.b16 %v250, %v246
    %v299 = vpack.c.b16 %v251, %v247
    %v300 = vpack.c.b16 %v252, %v248
    %v301 = vpack.c.b16 %v253, %v249
    %v302 = vpack.c.b16 %v258, %v254
    %v303 = vpack.c.b16 %v259, %v255
    %v304 = vpack.c.b16 %v260, %v256
    %v305 = vpack.c.b16 %v261, %v257
    %v306 = vpack.c.b16 %v266, %v262
    %v307 = vpack.c.b16 %v267, %v263
    %v308 = vpack.c.b16 %v268, %v264
    %v309 = vpack.c.b16 %v269, %v265
    %v310 = vpack.c.b16 %v274, %v270
    %v311 = vpack.c.b16 %v275, %v271
    %v312 = vpack.c.b16 %v276, %v272
    %v313 = vpack.c.b16 %v277, %v273
    %v314 = vpack.c.b16 %v282, %v278
    %v315 = vpack.c.b16 %v283, %v279
    %v316 = vpack.c.b16 %v284, %v280
    %v317 = vpack.c.b16 %v285, %v281
    %350 = vmatprep.subr.bf16.mxu0 %v315
    %351 = vmatpush1.bf16.msra.mxu0 %v314
    %352 = vmatprep.subr.bf16.mxu0 %v311
    %353 = vmatpush1.bf16.msra.mxu0 %v310
    %354 = vmatprep.subr.bf16.mxu0 %v307
    %355 = vmatpush1.bf16.msra.mxu0 %v306
    %356 = vmatprep.subr.bf16.mxu0 %v303
    %357 = vmatpush1.bf16.msra.mxu0 %v302
    %358 = vmatprep.subr.bf16.mxu0 %v299
    %359 = vmatpush1.bf16.msra.mxu0 %v298
    %360 = vmatprep.subr.bf16.mxu0 %v295
    %361 = vmatpush1.bf16.msra.mxu0 %v294
    %362 = vmatprep.subr.bf16.mxu0 %v291
    %363 = vmatpush1.bf16.msra.mxu0 %v290
    %364 = vmatprep.subr.bf16.mxu0 %v287
    %365 = vmatpush1.bf16.msra.mxu0 %v286
    %366 = vmatprep.subr.bf16.mxu0 0
    %367 = vmatpush2.bf16.msra.mxu0 0
    %368 = vmatprep.subr.bf16.mxu0 0
    %369 = vmatpush2.bf16.msra.mxu0 0
    %370 = vmatprep.subr.bf16.mxu0 0
    %371 = vmatpush2.bf16.msra.mxu0 0
    %372 = vmatprep.subr.bf16.mxu0 0
    %373 = vmatpush2.bf16.msra.mxu0 0
    %374 = vmatprep.subr.bf16.mxu0 0
    %375 = vmatpush2.bf16.msra.mxu0 0
    %376 = vmatprep.subr.bf16.mxu0 0
    %377 = vmatpush2.bf16.msra.mxu0 0
    %378 = vmatprep.subr.bf16.mxu0 0
    %379 = vmatpush2.bf16.msra.mxu0 0
    %380 = vmatprep.subr.bf16.mxu0 0
    %381 = vmatpush2.bf16.msra.mxu0 0
    %382 = vmatprep.mubr.bf16.mxu0 0
    %383 = vmatmul.mubr.bf16.gmra.mxu0 %v157
    %v384 = vpop.f32.mrf.mxu0
    %v385 = vadd.f32 0.0, %v384
    %v386 = vpop.f32.mrf.mxu0
    %v387 = vadd.f32 0.0, %v386
    %v388 = vpop.f32.mrf.mxu0
    %v389 = vadd.f32 0.0, %v388
    %v390 = vpop.f32.mrf.mxu0
    %v391 = vadd.f32 0.0, %v390
    %392 = vdwg.mxu0
    %393 = vmatprep.subr.bf16.mxu0 %v317
    %394 = vmatpush1.bf16.msra.mxu0 %v316
    %395 = vmatprep.subr.bf16.mxu0 %v313
    %396 = vmatpush1.bf16.msra.mxu0 %v312
    %397 = vmatprep.subr.bf16.mxu0 %v309
    %398 = vmatpush1.bf16.msra.mxu0 %v308
    %399 = vmatprep.subr.bf16.mxu0 %v305
    %400 = vmatpush1.bf16.msra.mxu0 %v304
    %401 = vmatprep.subr.bf16.mxu0 %v301
    %402 = vmatpush1.bf16.msra.mxu0 %v300
    %403 = vmatprep.subr.bf16.mxu0 %v297
    %404 = vmatpush1.bf16.msra.mxu0 %v296
    %405 = vmatprep.subr.bf16.mxu0 %v293
    %406 = vmatpush1.bf16.msra.mxu0 %v292
    %407 = vmatprep.subr.bf16.mxu0 %v289
    %408 = vmatpush1.bf16.msra.mxu0 %v288
    %409 = vmatprep.subr.bf16.mxu0 0
    %410 = vmatpush2.bf16.msra.mxu0 0
    %411 = vmatprep.subr.bf16.mxu0 0
    %412 = vmatpush2.bf16.msra.mxu0 0
    %413 = vmatprep.subr.bf16.mxu0 0
    %414 = vmatpush2.bf16.msra.mxu0 0
    %415 = vmatprep.subr.bf16.mxu0 0
    %416 = vmatpush2.bf16.msra.mxu0 0
    %417 = vmatprep.subr.bf16.mxu0 0
    %418 = vmatpush2.bf16.msra.mxu0 0
    %419 = vmatprep.subr.bf16.mxu0 0
    %420 = vmatpush2.bf16.msra.mxu0 0
    %421 = vmatprep.subr.bf16.mxu0 0
    %422 = vmatpush2.bf16.msra.mxu0 0
    %423 = vmatprep.subr.bf16.mxu0 0
    %424 = vmatpush2.bf16.msra.mxu0 0
    %425 = vmatprep.mubr.bf16.mxu0 0
    %426 = vmatmul.mubr.bf16.gmra.mxu0 %v157
    %v427 = vpop.f32.mrf.mxu0
    %v428 = vadd.f32 0.0, %v427
    %v429 = vpop.f32.mrf.mxu0
    %v430 = vadd.f32 0.0, %v429
    %v431 = vpop.f32.mrf.mxu0
    %v432 = vadd.f32 0.0, %v431
    %v433 = vpop.f32.mrf.mxu0
    %v434 = vadd.f32 0.0, %v433
    %435 = vdwg.mxu0
    %v438 = vunpack.c.l.b16 %v75
    %v439 = vunpack.c.h.b16 %v75
    %v440 = vunpack.c.l.b16 %v76
    %v441 = vunpack.c.h.b16 %v76
    %v442 = vpack.c.b16 %v440, %v438
    %v443 = vpack.c.b16 %v441, %v439
    %v510 = vunpack.c.l.b16 %v77
    %v511 = vunpack.c.h.b16 %v77
    %v512 = vunpack.c.l.b16 %v78
    %v513 = vunpack.c.h.b16 %v78
    %v514 = vunpack.c.l.b16 %v79
    %v515 = vunpack.c.h.b16 %v79
    %v516 = vunpack.c.l.b16 %v80
    %v517 = vunpack.c.h.b16 %v80
    %v518 = vunpack.c.l.b16 %v81
    %v519 = vunpack.c.h.b16 %v81
    %v520 = vunpack.c.l.b16 %v82
    %v521 = vunpack.c.h.b16 %v82
    %v522 = vunpack.c.l.b16 %v83
    %v523 = vunpack.c.h.b16 %v83
    %v524 = vunpack.c.l.b16 %v84
    %v525 = vunpack.c.h.b16 %v84
    %v526 = vunpack.c.l.b16 %v85
    %v527 = vunpack.c.h.b16 %v85
    %v528 = vunpack.c.l.b16 %v86
    %v529 = vunpack.c.h.b16 %v86
    %v530 = vunpack.c.l.b16 %v87
    %v531 = vunpack.c.h.b16 %v87
    %v532 = vunpack.c.l.b16 %v88
    %v533 = vunpack.c.h.b16 %v88
    %v534 = vunpack.c.l.b16 %v89
    %v535 = vunpack.c.h.b16 %v89
    %v536 = vunpack.c.l.b16 %v90
    %v537 = vunpack.c.h.b16 %v90
    %v538 = vunpack.c.l.b16 %v91
    %v539 = vunpack.c.h.b16 %v91
    %v540 = vunpack.c.l.b16 %v92
    %v541 = vunpack.c.h.b16 %v92
    %v542 = vunpack.c.l.b16 %v93
    %v543 = vunpack.c.h.b16 %v93
    %v544 = vunpack.c.l.b16 %v94
    %v545 = vunpack.c.h.b16 %v94
    %v546 = vunpack.c.l.b16 %v95
    %v547 = vunpack.c.h.b16 %v95
    %v548 = vunpack.c.l.b16 %v96
    %v549 = vunpack.c.h.b16 %v96
    %v550 = vunpack.c.l.b16 %v97
    %v551 = vunpack.c.h.b16 %v97
    %v552 = vunpack.c.l.b16 %v98
    %v553 = vunpack.c.h.b16 %v98
    %v554 = vunpack.c.l.b16 %v99
    %v555 = vunpack.c.h.b16 %v99
    %v556 = vunpack.c.l.b16 %v100
    %v557 = vunpack.c.h.b16 %v100
    %v558 = vunpack.c.l.b16 %v101
    %v559 = vunpack.c.h.b16 %v101
    %v560 = vunpack.c.l.b16 %v102
    %v561 = vunpack.c.h.b16 %v102
    %v562 = vunpack.c.l.b16 %v103
    %v563 = vunpack.c.h.b16 %v103
    %v564 = vunpack.c.l.b16 %v104
    %v565 = vunpack.c.h.b16 %v104
    %v566 = vunpack.c.l.b16 %v105
    %v567 = vunpack.c.h.b16 %v105
    %v568 = vunpack.c.l.b16 %v106
    %v569 = vunpack.c.h.b16 %v106
    %v570 = vunpack.c.l.b16 %v107
    %v571 = vunpack.c.h.b16 %v107
    %v572 = vunpack.c.l.b16 %v108
    %v573 = vunpack.c.h.b16 %v108
    %v574 = vunpack.c.l.b16 %v109
    %v575 = vunpack.c.h.b16 %v109
    %v576 = vunpack.c.l.b16 %v110
    %v577 = vunpack.c.h.b16 %v110
    %v578 = vunpack.c.l.b16 %v111
    %v579 = vunpack.c.h.b16 %v111
    %v580 = vunpack.c.l.b16 %v112
    %v581 = vunpack.c.h.b16 %v112
    %v582 = vunpack.c.l.b16 %v113
    %v583 = vunpack.c.h.b16 %v113
    %v584 = vunpack.c.l.b16 %v114
    %v585 = vunpack.c.h.b16 %v114
    %v586 = vunpack.c.l.b16 %v115
    %v587 = vunpack.c.h.b16 %v115
    %v588 = vunpack.c.l.b16 %v116
    %v589 = vunpack.c.h.b16 %v116
    %v590 = vunpack.c.l.b16 %v117
    %v591 = vunpack.c.h.b16 %v117
    %v592 = vunpack.c.l.b16 %v118
    %v593 = vunpack.c.h.b16 %v118
    %v594 = vunpack.c.l.b16 %v119
    %v595 = vunpack.c.h.b16 %v119
    %v596 = vunpack.c.l.b16 %v120
    %v597 = vunpack.c.h.b16 %v120
    %v598 = vunpack.c.l.b16 %v121
    %v599 = vunpack.c.h.b16 %v121
    %v600 = vunpack.c.l.b16 %v122
    %v601 = vunpack.c.h.b16 %v122
    %v602 = vunpack.c.l.b16 %v123
    %v603 = vunpack.c.h.b16 %v123
    %v604 = vunpack.c.l.b16 %v124
    %v605 = vunpack.c.h.b16 %v124
    %v606 = vunpack.c.l.b16 %v125
    %v607 = vunpack.c.h.b16 %v125
    %v608 = vunpack.c.l.b16 %v126
    %v609 = vunpack.c.h.b16 %v126
    %v610 = vunpack.c.l.b16 %v127
    %v611 = vunpack.c.h.b16 %v127
    %v612 = vunpack.c.l.b16 %v128
    %v613 = vunpack.c.h.b16 %v128
    %v614 = vunpack.c.l.b16 %v129
    %v615 = vunpack.c.h.b16 %v129
    %v616 = vunpack.c.l.b16 %v130
    %v617 = vunpack.c.h.b16 %v130
    %v618 = vunpack.c.l.b16 %v131
    %v619 = vunpack.c.h.b16 %v131
    %v620 = vunpack.c.l.b16 %v132
    %v621 = vunpack.c.h.b16 %v132
    %v622 = vunpack.c.l.b16 %v133
    %v623 = vunpack.c.h.b16 %v133
    %v624 = vunpack.c.l.b16 %v134
    %v625 = vunpack.c.h.b16 %v134
    %v626 = vunpack.c.l.b16 %v135
    %v627 = vunpack.c.h.b16 %v135
    %v628 = vunpack.c.l.b16 %v136
    %v629 = vunpack.c.h.b16 %v136
    %v630 = vunpack.c.l.b16 %v137
    %v631 = vunpack.c.h.b16 %v137
    %v632 = vunpack.c.l.b16 %v138
    %v633 = vunpack.c.h.b16 %v138
    %v634 = vunpack.c.l.b16 %v139
    %v635 = vunpack.c.h.b16 %v139
    %v636 = vunpack.c.l.b16 %v140
    %v637 = vunpack.c.h.b16 %v140
    %v638 = vpack.c.b16 %v514, %v510
    %v639 = vpack.c.b16 %v515, %v511
    %v640 = vpack.c.b16 %v516, %v512
    %v641 = vpack.c.b16 %v517, %v513
    %v642 = vpack.c.b16 %v522, %v518
    %v643 = vpack.c.b16 %v523, %v519
    %v644 = vpack.c.b16 %v524, %v520
    %v645 = vpack.c.b16 %v525, %v521
    %v646 = vpack.c.b16 %v530, %v526
    %v647 = vpack.c.b16 %v531, %v527
    %v648 = vpack.c.b16 %v532, %v528
    %v649 = vpack.c.b16 %v533, %v529
    %v650 = vpack.c.b16 %v538, %v534
    %v651 = vpack.c.b16 %v539, %v535
    %v652 = vpack.c.b16 %v540, %v536
    %v653 = vpack.c.b16 %v541, %v537
    %v654 = vpack.c.b16 %v546, %v542
    %v655 = vpack.c.b16 %v547, %v543
    %v656 = vpack.c.b16 %v548, %v544
    %v657 = vpack.c.b16 %v549, %v545
    %v658 = vpack.c.b16 %v554, %v550
    %v659 = vpack.c.b16 %v555, %v551
    %v660 = vpack.c.b16 %v556, %v552
    %v661 = vpack.c.b16 %v557, %v553
    %v662 = vpack.c.b16 %v562, %v558
    %v663 = vpack.c.b16 %v563, %v559
    %v664 = vpack.c.b16 %v564, %v560
    %v665 = vpack.c.b16 %v565, %v561
    %v666 = vpack.c.b16 %v570, %v566
    %v667 = vpack.c.b16 %v571, %v567
    %v668 = vpack.c.b16 %v572, %v568
    %v669 = vpack.c.b16 %v573, %v569
    %v670 = vpack.c.b16 %v578, %v574
    %v671 = vpack.c.b16 %v579, %v575
    %v672 = vpack.c.b16 %v580, %v576
    %v673 = vpack.c.b16 %v581, %v577
    %v674 = vpack.c.b16 %v586, %v582
    %v675 = vpack.c.b16 %v587, %v583
    %v676 = vpack.c.b16 %v588, %v584
    %v677 = vpack.c.b16 %v589, %v585
    %v678 = vpack.c.b16 %v594, %v590
    %v679 = vpack.c.b16 %v595, %v591
    %v680 = vpack.c.b16 %v596, %v592
    %v681 = vpack.c.b16 %v597, %v593
    %v682 = vpack.c.b16 %v602, %v598
    %v683 = vpack.c.b16 %v603, %v599
    %v684 = vpack.c.b16 %v604, %v600
    %v685 = vpack.c.b16 %v605, %v601
    %v686 = vpack.c.b16 %v610, %v606
    %v687 = vpack.c.b16 %v611, %v607
    %v688 = vpack.c.b16 %v612, %v608
    %v689 = vpack.c.b16 %v613, %v609
    %v690 = vpack.c.b16 %v618, %v614
    %v691 = vpack.c.b16 %v619, %v615
    %v692 = vpack.c.b16 %v620, %v616
    %v693 = vpack.c.b16 %v621, %v617
    %v694 = vpack.c.b16 %v626, %v622
    %v695 = vpack.c.b16 %v627, %v623
    %v696 = vpack.c.b16 %v628, %v624
    %v697 = vpack.c.b16 %v629, %v625
    %v698 = vpack.c.b16 %v634, %v630
    %v699 = vpack.c.b16 %v635, %v631
    %v700 = vpack.c.b16 %v636, %v632
    %v701 = vpack.c.b16 %v637, %v633
    %766 = vmatprep.subr.bf16.mxu0 %v667
    %767 = vmatpush1.bf16.msra.mxu0 %v666
    %768 = vmatprep.subr.bf16.mxu0 %v663
    %769 = vmatpush1.bf16.msra.mxu0 %v662
    %770 = vmatprep.subr.bf16.mxu0 %v659
    %771 = vmatpush1.bf16.msra.mxu0 %v658
    %772 = vmatprep.subr.bf16.mxu0 %v655
    %773 = vmatpush1.bf16.msra.mxu0 %v654
    %774 = vmatprep.subr.bf16.mxu0 %v651
    %775 = vmatpush1.bf16.msra.mxu0 %v650
    %776 = vmatprep.subr.bf16.mxu0 %v647
    %777 = vmatpush1.bf16.msra.mxu0 %v646
    %778 = vmatprep.subr.bf16.mxu0 %v643
    %779 = vmatpush1.bf16.msra.mxu0 %v642
    %780 = vmatprep.subr.bf16.mxu0 %v639
    %781 = vmatpush1.bf16.msra.mxu0 %v638
    %782 = vmatprep.subr.bf16.mxu0 %v699
    %783 = vmatpush2.bf16.msra.mxu0 %v698
    %784 = vmatprep.subr.bf16.mxu0 %v695
    %785 = vmatpush2.bf16.msra.mxu0 %v694
    %786 = vmatprep.subr.bf16.mxu0 %v691
    %787 = vmatpush2.bf16.msra.mxu0 %v690
    %788 = vmatprep.subr.bf16.mxu0 %v687
    %789 = vmatpush2.bf16.msra.mxu0 %v686
    %790 = vmatprep.subr.bf16.mxu0 %v683
    %791 = vmatpush2.bf16.msra.mxu0 %v682
    %792 = vmatprep.subr.bf16.mxu0 %v679
    %793 = vmatpush2.bf16.msra.mxu0 %v678
    %794 = vmatprep.subr.bf16.mxu0 %v675
    %795 = vmatpush2.bf16.msra.mxu0 %v674
    %796 = vmatprep.subr.bf16.mxu0 %v671
    %797 = vmatpush2.bf16.msra.mxu0 %v670
    %798 = vmatprep.mubr.bf16.mxu0 %v443
    %799 = vmatmul.mubr.bf16.gmra.mxu0 %v442
    %v800 = vpop.f32.mrf.mxu0
    %v801 = vadd.f32 %v385, %v800
    %v802 = vpop.f32.mrf.mxu0
    %v803 = vadd.f32 %v387, %v802
    %v804 = vpop.f32.mrf.mxu0
    %v805 = vadd.f32 %v389, %v804
    %v806 = vpop.f32.mrf.mxu0
    %v807 = vadd.f32 %v391, %v806
    %808 = vdwg.mxu0
    %809 = vmatprep.subr.bf16.mxu0 %v669
    %810 = vmatpush1.bf16.msra.mxu0 %v668
    %811 = vmatprep.subr.bf16.mxu0 %v665
    %812 = vmatpush1.bf16.msra.mxu0 %v664
    %813 = vmatprep.subr.bf16.mxu0 %v661
    %814 = vmatpush1.bf16.msra.mxu0 %v660
    %815 = vmatprep.subr.bf16.mxu0 %v657
    %816 = vmatpush1.bf16.msra.mxu0 %v656
    %817 = vmatprep.subr.bf16.mxu0 %v653
    %818 = vmatpush1.bf16.msra.mxu0 %v652
    %819 = vmatprep.subr.bf16.mxu0 %v649
    %820 = vmatpush1.bf16.msra.mxu0 %v648
    %821 = vmatprep.subr.bf16.mxu0 %v645
    %822 = vmatpush1.bf16.msra.mxu0 %v644
    %823 = vmatprep.subr.bf16.mxu0 %v641
    %824 = vmatpush1.bf16.msra.mxu0 %v640
    %825 = vmatprep.subr.bf16.mxu0 %v701
    %826 = vmatpush2.bf16.msra.mxu0 %v700
    %827 = vmatprep.subr.bf16.mxu0 %v697
    %828 = vmatpush2.bf16.msra.mxu0 %v696
    %829 = vmatprep.subr.bf16.mxu0 %v693
    %830 = vmatpush2.bf16.msra.mxu0 %v692
    %831 = vmatprep.subr.bf16.mxu0 %v689
    %832 = vmatpush2.bf16.msra.mxu0 %v688
    %833 = vmatprep.subr.bf16.mxu0 %v685
    %834 = vmatpush2.bf16.msra.mxu0 %v684
    %835 = vmatprep.subr.bf16.mxu0 %v681
    %836 = vmatpush2.bf16.msra.mxu0 %v680
    %837 = vmatprep.subr.bf16.mxu0 %v677
    %838 = vmatpush2.bf16.msra.mxu0 %v676
    %839 = vmatprep.subr.bf16.mxu0 %v673
    %840 = vmatpush2.bf16.msra.mxu0 %v672
    %841 = vmatprep.mubr.bf16.mxu0 %v443
    %842 = vmatmul.mubr.bf16.gmra.mxu0 %v442
    %v843 = vpop.f32.mrf.mxu0
    %v844 = vadd.f32 %v428, %v843
    %v845 = vpop.f32.mrf.mxu0
    %v846 = vadd.f32 %v430, %v845
    %v847 = vpop.f32.mrf.mxu0
    %v848 = vadd.f32 %v432, %v847
    %v849 = vpop.f32.mrf.mxu0
    %v850 = vadd.f32 %v434, %v849
    %851 = vdwg.mxu0
    %v852 = vld [vmem:[%s4] sm:$0xf]
    %v854 = vlaneseq
    %v855 = vshrl.u32 %v854, 7
    %v856 = vsub.s32 0, %v855
    %v857 = vrot.slane %v852, %v856
    %v858 = vlaneseq
    %v859 = vshrl.u32 %v858, 7
    %v860 = vsub.s32 1, %v859
    %v861 = vrot.slane %v852, %v860
    %v862 = vlaneseq
    %v863 = vshrl.u32 %v862, 7
    %v864 = vsub.s32 2, %v863
    %v865 = vrot.slane %v852, %v864
    %v866 = vlaneseq
    %v867 = vshrl.u32 %v866, 7
    %v868 = vsub.s32 3, %v867
    %v869 = vrot.slane %v852, %v868
    %v874 = vadd.f32 %v801, %v857
    %v875 = vadd.f32 %v803, %v861
    %v876 = vadd.f32 %v844, %v865
    %v877 = vadd.f32 %v846, %v869
    %v878 = vadd.f32 %v805, %v857
    %v879 = vadd.f32 %v807, %v861
    %v880 = vadd.f32 %v848, %v865
    %v881 = vadd.f32 %v850, %v869
    %vm882 = vcmp.gt.f32.partialorder %v874, 0.0
    %vm883 = vcmp.gt.f32.partialorder %v875, 0.0
    %vm884 = vcmp.gt.f32.partialorder %v876, 0.0
    %vm885 = vcmp.gt.f32.partialorder %v877, 0.0
    %vm886 = vcmp.gt.f32.partialorder %v878, 0.0
    %vm887 = vcmp.gt.f32.partialorder %v879, 0.0
    %vm888 = vcmp.gt.f32.partialorder %v880, 0.0
    %vm889 = vcmp.gt.f32.partialorder %v881, 0.0
    %v890 = vmul.f32 %v874, 0.2
    %v891 = vmul.f32 %v875, 0.2
    %v892 = vmul.f32 %v876, 0.2
    %v893 = vmul.f32 %v877, 0.2
    %v894 = vmul.f32 %v878, 0.2
    %v895 = vmul.f32 %v879, 0.2
    %v896 = vmul.f32 %v880, 0.2
    %v897 = vmul.f32 %v881, 0.2
    %v898 = vsel %vm882, %v874, %v890
    %v899 = vsel %vm883, %v875, %v891
    %v900 = vsel %vm884, %v876, %v892
    %v901 = vsel %vm885, %v877, %v893
    %v902 = vsel %vm886, %v878, %v894
    %v903 = vsel %vm887, %v879, %v895
    %v904 = vsel %vm888, %v880, %v896
    %v905 = vsel %vm889, %v881, %v897
    %v906 = vpack.c.bf16 %v902, %v898
    %v907 = vpack.c.bf16 %v903, %v899
    %v908 = vpack.c.bf16 %v904, %v900
    %v909 = vpack.c.bf16 %v905, %v901
    %v910 = vld [vmem:[#allocation7] sm:$0xff]
    %v911 = vld [vmem:[#allocation7 + $0x8] sm:$0xff]
    %v912 = vld [vmem:[#allocation7 + $0x10] sm:$0xff]
    %v913 = vld [vmem:[#allocation7 + $0x18] sm:$0xff]
    %v914 = vld [vmem:[#allocation7 + $0x20] sm:$0xff]
    %v915 = vld [vmem:[#allocation7 + $0x28] sm:$0xff]
    %v916 = vld [vmem:[#allocation7 + $0x30] sm:$0xff]
    %v917 = vld [vmem:[#allocation7 + $0x38] sm:$0xff]
    %v918 = vld [vmem:[#allocation7 + $0x40] sm:$0xff]
    %v919 = vld [vmem:[#allocation7 + $0x48] sm:$0xff]
    %v920 = vld [vmem:[#allocation7 + $0x50] sm:$0xff]
    %v921 = vld [vmem:[#allocation7 + $0x58] sm:$0xff]
    %v922 = vld [vmem:[#allocation7 + $0x60] sm:$0xff]
    %v923 = vld [vmem:[#allocation7 + $0x68] sm:$0xff]
    %v924 = vld [vmem:[#allocation7 + $0x70] sm:$0xff]
    %v925 = vld [vmem:[#allocation7 + $0x78] sm:$0xff]
    %v926 = vld [vmem:[#allocation7 + $0x80] sm:$0xff]
    %v927 = vld [vmem:[#allocation7 + $0x88] sm:$0xff]
    %v928 = vld [vmem:[#allocation7 + $0x90] sm:$0xff]
    %v929 = vld [vmem:[#allocation7 + $0x98] sm:$0xff]
    %v930 = vld [vmem:[#allocation7 + $0xa0] sm:$0xff]
    %v931 = vld [vmem:[#allocation7 + $0xa8] sm:$0xff]
    %v932 = vld [vmem:[#allocation7 + $0xb0] sm:$0xff]
    %v933 = vld [vmem:[#allocation7 + $0xb8] sm:$0xff]
    %v934 = vld [vmem:[#allocation7 + $0xc0] sm:$0xff]
    %v935 = vld [vmem:[#allocation7 + $0xc8] sm:$0xff]
    %v936 = vld [vmem:[#allocation7 + $0xd0] sm:$0xff]
    %v937 = vld [vmem:[#allocation7 + $0xd8] sm:$0xff]
    %v938 = vld [vmem:[#allocation7 + $0xe0] sm:$0xff]
    %v939 = vld [vmem:[#allocation7 + $0xe8] sm:$0xff]
    %v940 = vld [vmem:[#allocation7 + $0xf0] sm:$0xff]
    %v941 = vld [vmem:[#allocation7 + $0xf8] sm:$0xff]
    %v942 = vld [vmem:[#allocation7 + $0x100] sm:$0xff]
    %v943 = vld [vmem:[#allocation7 + $0x108] sm:$0xff]
    %v944 = vld [vmem:[#allocation7 + $0x110] sm:$0xff]
    %v945 = vld [vmem:[#allocation7 + $0x118] sm:$0xff]
    %v946 = vld [vmem:[#allocation7 + $0x120] sm:$0xff]
    %v947 = vld [vmem:[#allocation7 + $0x128] sm:$0xff]
    %v948 = vld [vmem:[#allocation7 + $0x130] sm:$0xff]
    %v949 = vld [vmem:[#allocation7 + $0x138] sm:$0xff]
    %v950 = vld [vmem:[#allocation7 + $0x140] sm:$0xff]
    %v951 = vld [vmem:[#allocation7 + $0x148] sm:$0xff]
    %v952 = vld [vmem:[#allocation7 + $0x150] sm:$0xff]
    %v953 = vld [vmem:[#allocation7 + $0x158] sm:$0xff]
    %v954 = vld [vmem:[#allocation7 + $0x160] sm:$0xff]
    %v955 = vld [vmem:[#allocation7 + $0x168] sm:$0xff]
    %v956 = vld [vmem:[#allocation7 + $0x170] sm:$0xff]
    %v957 = vld [vmem:[#allocation7 + $0x178] sm:$0xff]
    %v958 = vld [vmem:[#allocation7 + $0x180] sm:$0xff]
    %v959 = vld [vmem:[#allocation7 + $0x188] sm:$0xff]
    %v960 = vld [vmem:[#allocation7 + $0x190] sm:$0xff]
    %v961 = vld [vmem:[#allocation7 + $0x198] sm:$0xff]
    %v962 = vld [vmem:[#allocation7 + $0x1a0] sm:$0xff]
    %v963 = vld [vmem:[#allocation7 + $0x1a8] sm:$0xff]
    %v964 = vld [vmem:[#allocation7 + $0x1b0] sm:$0xff]
    %v965 = vld [vmem:[#allocation7 + $0x1b8] sm:$0xff]
    %v966 = vld [vmem:[#allocation7 + $0x1c0] sm:$0xff]
    %v967 = vld [vmem:[#allocation7 + $0x1c8] sm:$0xff]
    %v968 = vld [vmem:[#allocation7 + $0x1d0] sm:$0xff]
    %v969 = vld [vmem:[#allocation7 + $0x1d8] sm:$0xff]
    %v970 = vld [vmem:[#allocation7 + $0x1e0] sm:$0xff]
    %v971 = vld [vmem:[#allocation7 + $0x1e8] sm:$0xff]
    %v972 = vld [vmem:[#allocation7 + $0x1f0] sm:$0xff]
    %v973 = vld [vmem:[#allocation7 + $0x1f8] sm:$0xff]
    %v974 = vld [vmem:[%s6] sm:$0x3]
    %v976 = vlaneseq
    %v977 = vshrl.u32 %v976, 7
    %v978 = vsub.s32 0, %v977
    %v979 = vrot.slane %v974, %v978
    %v980 = vlaneseq
    %v981 = vshrl.u32 %v980, 7
    %v982 = vsub.s32 1, %v981
    %v983 = vrot.slane %v974, %v982
    %v1050 = vunpack.c.l.b16 %v910
    %v1051 = vunpack.c.h.b16 %v910
    %v1052 = vunpack.c.l.b16 %v911
    %v1053 = vunpack.c.h.b16 %v911
    %v1054 = vunpack.c.l.b16 %v912
    %v1055 = vunpack.c.h.b16 %v912
    %v1056 = vunpack.c.l.b16 %v913
    %v1057 = vunpack.c.h.b16 %v913
    %v1058 = vunpack.c.l.b16 %v914
    %v1059 = vunpack.c.h.b16 %v914
    %v1060 = vunpack.c.l.b16 %v915
    %v1061 = vunpack.c.h.b16 %v915
    %v1062 = vunpack.c.l.b16 %v916
    %v1063 = vunpack.c.h.b16 %v916
    %v1064 = vunpack.c.l.b16 %v917
    %v1065 = vunpack.c.h.b16 %v917
    %v1066 = vunpack.c.l.b16 %v918
    %v1067 = vunpack.c.h.b16 %v918
    %v1068 = vunpack.c.l.b16 %v919
    %v1069 = vunpack.c.h.b16 %v919
    %v1070 = vunpack.c.l.b16 %v920
    %v1071 = vunpack.c.h.b16 %v920
    %v1072 = vunpack.c.l.b16 %v921
    %v1073 = vunpack.c.h.b16 %v921
    %v1074 = vunpack.c.l.b16 %v922
    %v1075 = vunpack.c.h.b16 %v922
    %v1076 = vunpack.c.l.b16 %v923
    %v1077 = vunpack.c.h.b16 %v923
    %v1078 = vunpack.c.l.b16 %v924
    %v1079 = vunpack.c.h.b16 %v924
    %v1080 = vunpack.c.l.b16 %v925
    %v1081 = vunpack.c.h.b16 %v925
    %v1082 = vunpack.c.l.b16 %v926
    %v1083 = vunpack.c.h.b16 %v926
    %v1084 = vunpack.c.l.b16 %v927
    %v1085 = vunpack.c.h.b16 %v927
    %v1086 = vunpack.c.l.b16 %v928
    %v1087 = vunpack.c.h.b16 %v928
    %v1088 = vunpack.c.l.b16 %v929
    %v1089 = vunpack.c.h.b16 %v929
    %v1090 = vunpack.c.l.b16 %v930
    %v1091 = vunpack.c.h.b16 %v930
    %v1092 = vunpack.c.l.b16 %v931
    %v1093 = vunpack.c.h.b16 %v931
    %v1094 = vunpack.c.l.b16 %v932
    %v1095 = vunpack.c.h.b16 %v932
    %v1096 = vunpack.c.l.b16 %v933
    %v1097 = vunpack.c.h.b16 %v933
    %v1098 = vunpack.c.l.b16 %v934
    %v1099 = vunpack.c.h.b16 %v934
    %v1100 = vunpack.c.l.b16 %v935
    %v1101 = vunpack.c.h.b16 %v935
    %v1102 = vunpack.c.l.b16 %v936
    %v1103 = vunpack.c.h.b16 %v936
    %v1104 = vunpack.c.l.b16 %v937
    %v1105 = vunpack.c.h.b16 %v937
    %v1106 = vunpack.c.l.b16 %v938
    %v1107 = vunpack.c.h.b16 %v938
    %v1108 = vunpack.c.l.b16 %v939
    %v1109 = vunpack.c.h.b16 %v939
    %v1110 = vunpack.c.l.b16 %v940
    %v1111 = vunpack.c.h.b16 %v940
    %v1112 = vunpack.c.l.b16 %v941
    %v1113 = vunpack.c.h.b16 %v941
    %v1114 = vunpack.c.l.b16 %v942
    %v1115 = vunpack.c.h.b16 %v942
    %v1116 = vunpack.c.l.b16 %v943
    %v1117 = vunpack.c.h.b16 %v943
    %v1118 = vunpack.c.l.b16 %v944
    %v1119 = vunpack.c.h.b16 %v944
    %v1120 = vunpack.c.l.b16 %v945
    %v1121 = vunpack.c.h.b16 %v945
    %v1122 = vunpack.c.l.b16 %v946
    %v1123 = vunpack.c.h.b16 %v946
    %v1124 = vunpack.c.l.b16 %v947
    %v1125 = vunpack.c.h.b16 %v947
    %v1126 = vunpack.c.l.b16 %v948
    %v1127 = vunpack.c.h.b16 %v948
    %v1128 = vunpack.c.l.b16 %v949
    %v1129 = vunpack.c.h.b16 %v949
    %v1130 = vunpack.c.l.b16 %v950
    %v1131 = vunpack.c.h.b16 %v950
    %v1132 = vunpack.c.l.b16 %v951
    %v1133 = vunpack.c.h.b16 %v951
    %v1134 = vunpack.c.l.b16 %v952
    %v1135 = vunpack.c.h.b16 %v952
    %v1136 = vunpack.c.l.b16 %v953
    %v1137 = vunpack.c.h.b16 %v953
    %v1138 = vunpack.c.l.b16 %v954
    %v1139 = vunpack.c.h.b16 %v954
    %v1140 = vunpack.c.l.b16 %v955
    %v1141 = vunpack.c.h.b16 %v955
    %v1142 = vunpack.c.l.b16 %v956
    %v1143 = vunpack.c.h.b16 %v956
    %v1144 = vunpack.c.l.b16 %v957
    %v1145 = vunpack.c.h.b16 %v957
    %v1146 = vunpack.c.l.b16 %v958
    %v1147 = vunpack.c.h.b16 %v958
    %v1148 = vunpack.c.l.b16 %v959
    %v1149 = vunpack.c.h.b16 %v959
    %v1150 = vunpack.c.l.b16 %v960
    %v1151 = vunpack.c.h.b16 %v960
    %v1152 = vunpack.c.l.b16 %v961
    %v1153 = vunpack.c.h.b16 %v961
    %v1154 = vunpack.c.l.b16 %v962
    %v1155 = vunpack.c.h.b16 %v962
    %v1156 = vunpack.c.l.b16 %v963
    %v1157 = vunpack.c.h.b16 %v963
    %v1158 = vunpack.c.l.b16 %v964
    %v1159 = vunpack.c.h.b16 %v964
    %v1160 = vunpack.c.l.b16 %v965
    %v1161 = vunpack.c.h.b16 %v965
    %v1162 = vunpack.c.l.b16 %v966
    %v1163 = vunpack.c.h.b16 %v966
    %v1164 = vunpack.c.l.b16 %v967
    %v1165 = vunpack.c.h.b16 %v967
    %v1166 = vunpack.c.l.b16 %v968
    %v1167 = vunpack.c.h.b16 %v968
    %v1168 = vunpack.c.l.b16 %v969
    %v1169 = vunpack.c.h.b16 %v969
    %v1170 = vunpack.c.l.b16 %v970
    %v1171 = vunpack.c.h.b16 %v970
    %v1172 = vunpack.c.l.b16 %v971
    %v1173 = vunpack.c.h.b16 %v971
    %v1174 = vunpack.c.l.b16 %v972
    %v1175 = vunpack.c.h.b16 %v972
    %v1176 = vunpack.c.l.b16 %v973
    %v1177 = vunpack.c.h.b16 %v973
    %v1178 = vpack.c.b16 %v1052, %v1050
    %v1179 = vpack.c.b16 %v1053, %v1051
    %v1180 = vpack.c.b16 %v1056, %v1054
    %v1181 = vpack.c.b16 %v1057, %v1055
    %v1182 = vpack.c.b16 %v1060, %v1058
    %v1183 = vpack.c.b16 %v1061, %v1059
    %v1184 = vpack.c.b16 %v1064, %v1062
    %v1185 = vpack.c.b16 %v1065, %v1063
    %v1186 = vpack.c.b16 %v1068, %v1066
    %v1187 = vpack.c.b16 %v1069, %v1067
    %v1188 = vpack.c.b16 %v1072, %v1070
    %v1189 = vpack.c.b16 %v1073, %v1071
    %v1190 = vpack.c.b16 %v1076, %v1074
    %v1191 = vpack.c.b16 %v1077, %v1075
    %v1192 = vpack.c.b16 %v1080, %v1078
    %v1193 = vpack.c.b16 %v1081, %v1079
    %v1194 = vpack.c.b16 %v1084, %v1082
    %v1195 = vpack.c.b16 %v1085, %v1083
    %v1196 = vpack.c.b16 %v1088, %v1086
    %v1197 = vpack.c.b16 %v1089, %v1087
    %v1198 = vpack.c.b16 %v1092, %v1090
    %v1199 = vpack.c.b16 %v1093, %v1091
    %v1200 = vpack.c.b16 %v1096, %v1094
    %v1201 = vpack.c.b16 %v1097, %v1095
    %v1202 = vpack.c.b16 %v1100, %v1098
    %v1203 = vpack.c.b16 %v1101, %v1099
    %v1204 = vpack.c.b16 %v1104, %v1102
    %v1205 = vpack.c.b16 %v1105, %v1103
    %v1206 = vpack.c.b16 %v1108, %v1106
    %v1207 = vpack.c.b16 %v1109, %v1107
    %v1208 = vpack.c.b16 %v1112, %v1110
    %v1209 = vpack.c.b16 %v1113, %v1111
    %v1210 = vpack.c.b16 %v1116, %v1114
    %v1211 = vpack.c.b16 %v1117, %v1115
    %v1212 = vpack.c.b16 %v1120, %v1118
    %v1213 = vpack.c.b16 %v1121, %v1119
    %v1214 = vpack.c.b16 %v1124, %v1122
    %v1215 = vpack.c.b16 %v1125, %v1123
    %v1216 = vpack.c.b16 %v1128, %v1126
    %v1217 = vpack.c.b16 %v1129, %v1127
    %v1218 = vpack.c.b16 %v1132, %v1130
    %v1219 = vpack.c.b16 %v1133, %v1131
    %v1220 = vpack.c.b16 %v1136, %v1134
    %v1221 = vpack.c.b16 %v1137, %v1135
    %v1222 = vpack.c.b16 %v1140, %v1138
    %v1223 = vpack.c.b16 %v1141, %v1139
    %v1224 = vpack.c.b16 %v1144, %v1142
    %v1225 = vpack.c.b16 %v1145, %v1143
    %v1226 = vpack.c.b16 %v1148, %v1146
    %v1227 = vpack.c.b16 %v1149, %v1147
    %v1228 = vpack.c.b16 %v1152, %v1150
    %v1229 = vpack.c.b16 %v1153, %v1151
    %v1230 = vpack.c.b16 %v1156, %v1154
    %v1231 = vpack.c.b16 %v1157, %v1155
    %v1232 = vpack.c.b16 %v1160, %v1158
    %v1233 = vpack.c.b16 %v1161, %v1159
    %v1234 = vpack.c.b16 %v1164, %v1162
    %v1235 = vpack.c.b16 %v1165, %v1163
    %v1236 = vpack.c.b16 %v1168, %v1166
    %v1237 = vpack.c.b16 %v1169, %v1167
    %v1238 = vpack.c.b16 %v1172, %v1170
    %v1239 = vpack.c.b16 %v1173, %v1171
    %v1240 = vpack.c.b16 %v1176, %v1174
    %v1241 = vpack.c.b16 %v1177, %v1175
    %1306 = vmatprep.subr.bf16.mxu0 %v1193
    %1307 = vmatpush1.bf16.msra.mxu0 %v1192
    %1308 = vmatprep.subr.bf16.mxu0 %v1191
    %1309 = vmatpush1.bf16.msra.mxu0 %v1190
    %1310 = vmatprep.subr.bf16.mxu0 %v1189
    %1311 = vmatpush1.bf16.msra.mxu0 %v1188
    %1312 = vmatprep.subr.bf16.mxu0 %v1187
    %1313 = vmatpush1.bf16.msra.mxu0 %v1186
    %1314 = vmatprep.subr.bf16.mxu0 %v1185
    %1315 = vmatpush1.bf16.msra.mxu0 %v1184
    %1316 = vmatprep.subr.bf16.mxu0 %v1183
    %1317 = vmatpush1.bf16.msra.mxu0 %v1182
    %1318 = vmatprep.subr.bf16.mxu0 %v1181
    %1319 = vmatpush1.bf16.msra.mxu0 %v1180
    %1320 = vmatprep.subr.bf16.mxu0 %v1179
    %1321 = vmatpush1.bf16.msra.mxu0 %v1178
    %1322 = vmatprep.subr.bf16.mxu0 %v1209
    %1323 = vmatpush2.bf16.msra.mxu0 %v1208
    %1324 = vmatprep.subr.bf16.mxu0 %v1207
    %1325 = vmatpush2.bf16.msra.mxu0 %v1206
    %1326 = vmatprep.subr.bf16.mxu0 %v1205
    %1327 = vmatpush2.bf16.msra.mxu0 %v1204
    %1328 = vmatprep.subr.bf16.mxu0 %v1203
    %1329 = vmatpush2.bf16.msra.mxu0 %v1202
    %1330 = vmatprep.subr.bf16.mxu0 %v1201
    %1331 = vmatpush2.bf16.msra.mxu0 %v1200
    %1332 = vmatprep.subr.bf16.mxu0 %v1199
    %1333 = vmatpush2.bf16.msra.mxu0 %v1198
    %1334 = vmatprep.subr.bf16.mxu0 %v1197
    %1335 = vmatpush2.bf16.msra.mxu0 %v1196
    %1336 = vmatprep.subr.bf16.mxu0 %v1195
    %1337 = vmatpush2.bf16.msra.mxu0 %v1194
    %1338 = vmatprep.mubr.bf16.mxu0 %v907
    %1339 = vmatmul.mubr.bf16.gmra.mxu0 %v906
    %v1340 = vpop.f32.mrf.mxu0
    %v1341 = vadd.f32 %v979, %v1340
    %v1342 = vpop.f32.mrf.mxu0
    %v1343 = vadd.f32 %v983, %v1342
    %v1344 = vpop.f32.mrf.mxu0
    %v1345 = vadd.f32 %v979, %v1344
    %v1346 = vpop.f32.mrf.mxu0
    %v1347 = vadd.f32 %v983, %v1346
    %1348 = vdwg.mxu0
    %1349 = vmatprep.subr.bf16.mxu0 %v1225
    %1350 = vmatpush1.bf16.msra.mxu0 %v1224
    %1351 = vmatprep.subr.bf16.mxu0 %v1223
    %1352 = vmatpush1.bf16.msra.mxu0 %v1222
    %1353 = vmatprep.subr.bf16.mxu0 %v1221
    %1354 = vmatpush1.bf16.msra.mxu0 %v1220
    %1355 = vmatprep.subr.bf16.mxu0 %v1219
    %1356 = vmatpush1.bf16.msra.mxu0 %v1218
    %1357 = vmatprep.subr.bf16.mxu0 %v1217
    %1358 = vmatpush1.bf16.msra.mxu0 %v1216
    %1359 = vmatprep.subr.bf16.mxu0 %v1215
    %1360 = vmatpush1.bf16.msra.mxu0 %v1214
    %1361 = vmatprep.subr.bf16.mxu0 %v1213
    %1362 = vmatpush1.bf16.msra.mxu0 %v1212
    %1363 = vmatprep.subr.bf16.mxu0 %v1211
    %1364 = vmatpush1.bf16.msra.mxu0 %v1210
    %1365 = vmatprep.subr.bf16.mxu0 %v1241
    %1366 = vmatpush2.bf16.msra.mxu0 %v1240
    %1367 = vmatprep.subr.bf16.mxu0 %v1239
    %1368 = vmatpush2.bf16.msra.mxu0 %v1238
    %1369 = vmatprep.subr.bf16.mxu0 %v1237
    %1370 = vmatpush2.bf16.msra.mxu0 %v1236
    %1371 = vmatprep.subr.bf16.mxu0 %v1235
    %1372 = vmatpush2.bf16.msra.mxu0 %v1234
    %1373 = vmatprep.subr.bf16.mxu0 %v1233
    %1374 = vmatpush2.bf16.msra.mxu0 %v1232
    %1375 = vmatprep.subr.bf16.mxu0 %v1231
    %1376 = vmatpush2.bf16.msra.mxu0 %v1230
    %1377 = vmatprep.subr.bf16.mxu0 %v1229
    %1378 = vmatpush2.bf16.msra.mxu0 %v1228
    %1379 = vmatprep.subr.bf16.mxu0 %v1227
    %1380 = vmatpush2.bf16.msra.mxu0 %v1226
    %1381 = vmatprep.mubr.bf16.mxu0 %v909
    %1382 = vmatmul.mubr.bf16.gmra.mxu0 %v908
    %v1383 = vpop.f32.mrf.mxu0
    %v1384 = vadd.f32 %v1341, %v1383
    %v1385 = vpop.f32.mrf.mxu0
    %v1386 = vadd.f32 %v1343, %v1385
    %v1387 = vpop.f32.mrf.mxu0
    %v1388 = vadd.f32 %v1345, %v1387
    %v1389 = vpop.f32.mrf.mxu0
    %v1390 = vadd.f32 %v1347, %v1389
    %1391 = vdwg.mxu0
    %vm1392 = vcmp.gt.f32.partialorder %v1384, 0.0
    %vm1393 = vcmp.gt.f32.partialorder %v1386, 0.0
    %vm1394 = vcmp.gt.f32.partialorder %v1388, 0.0
    %vm1395 = vcmp.gt.f32.partialorder %v1390, 0.0
    %v1396 = vmul.f32 %v1384, 0.2
    %v1397 = vmul.f32 %v1386, 0.2
    %v1398 = vmul.f32 %v1388, 0.2
    %v1399 = vmul.f32 %v1390, 0.2
    %v1400 = vsel %vm1392, %v1384, %v1396
    %v1401 = vsel %vm1393, %v1386, %v1397
    %v1402 = vsel %vm1394, %v1388, %v1398
    %v1403 = vsel %vm1395, %v1390, %v1399
    %v1404 = vld [vmem:[%s7] sm:$0x3]
    %v1406 = vlaneseq
    %v1407 = vshrl.u32 %v1406, 7
    %v1408 = vsub.s32 0, %v1407
    %v1409 = vrot.slane %v1404, %v1408
    %v1410 = vlaneseq
    %v1411 = vshrl.u32 %v1410, 7
    %v1412 = vsub.s32 1, %v1411
    %v1413 = vrot.slane %v1404, %v1412
    %v1416 = vmul.f32 %v1400, %v1409
    %v1417 = vmul.f32 %v1401, %v1413
    %v1418 = vmul.f32 %v1402, %v1409
    %v1419 = vmul.f32 %v1403, %v1413
    %v1420 = vadd.f32 %v1416, %v1417
    %1421 = vadd.xlane.f32.xlu0 %v1420
    %v1422 = vpop.xlane.xlu0 %1421
    %v1423 = vadd.f32 %v1418, %v1419
    %1424 = vadd.xlane.f32.xlu0 %v1423
    %v1425 = vpop.xlane.xlu0 %1424
    %s1426 = sld [smem:[#allocation2]]
    %v1427 = vstv %s1426
    %v1428 = vadd.f32 %v1422, %v1427
    %v1429 = vadd.f32 %v1425, %v1427
    %v1430 = vsub.f32 0.0, %v1428
    %v1431 = vsub.f32 0.0, %v1429
    %v1432 = vmul.f32 %v1430, 1.442695
    %v1433 = vpow.pop %v1432
    %v1434 = vmul.f32 %v1431, 1.442695
    %v1435 = vpow.pop %v1434
    %v1436 = vadd.f32 %v1433, 1.0
    %v1437 = vadd.f32 %v1435, 1.0
    %v1438 = vrcp.pop %v1436
    %v1439 = vrcp.pop %v1437
    %vm1440 = vcmask 7168
    %1441 = vst.msk [vmem:[%s9] sm:$0xff] %vm1440, %v1438
    %1442 = vst.msk [vmem:[%s9 + $0x8] sm:$0xff] %vm1440, %v1439
    // Predicated region
    $region50: #{discriminator_forward.1} parent=1 // pred_check
      _
    $region51: #{discriminator_forward.1} parent=1 // pred_check_branch
      %1444 = sbr.rel (0) target = $region53
    $region52: #{discriminator_forward.1} parent=1 // pred_region
      _
    $region53: #{discriminator_forward.1} parent=1 // pred_fallthru
      _
    // Predicated region
    $region54: #{discriminator_forward.1} parent=1 // pred_check
      _
    $region55: #{discriminator_forward.1} parent=1 // pred_check_branch
      %1446 = sbr.rel (0) target = $region57
    $region56: #{discriminator_forward.1} parent=1 // pred_region
      _
    $region57: #{discriminator_forward.1} parent=1 // pred_fallthru
      _
    %1447 = vsyncpa [#allocation4], 1
    %1448 = vsyncpa [#allocation6], 1

</llo_original>
